<compile_context>
chip_gen: v5e
topology: v5e:2x2
jax: 0.10.0
libtpu: 0.0.40
codegen_flags: <defaults>
</compile_context>

<pallas_src>
import jax
import jax.numpy as jnp
from jax.experimental import pallas as pl
from jax.experimental.pallas import tpu as pltpu


def _round_up(x: int, m: int) -> int:
    return -(-x // m) * m


def _physical_vmem_bytes() -> int:
    """Best-effort per-core VMEM capacity; conservative (v7x-sized) fallback."""
    try:
        get_info = getattr(pltpu, "get_tpu_info", None)
        if get_info is not None:
            info = get_info()
            for attr in ("vmem_capacity_bytes", "vmem_size_bytes", "vmem_bytes"):
                v = getattr(info, attr, None)
                if v:
                    return int(v)
    except Exception:
        pass
    return 64 << 20


def _choose_lane_layout(n: int, pack: int):
    """Pick lane width L (multiple of 128) and padded flat length N_pad.

    Preference: (1) padding overhead <= 1/16, (2) lanes >= 512 (measured ~85%
    of HBM roofline vs ~29% at 128), (3) zero padding (no extra traffic, no
    wrapper-side slice copy), (4) minimal padding, (5) sublane-dense row count,
    (6) wider lanes.
    """
    cands = (2048, 1792, 1536, 1280, 1152, 1024, 896, 768, 640, 512,
             384, 256, 128)
    best = None
    for lane in cands:
        if lane > n and lane != 128:
            continue
        n_pad = _round_up(n, lane)
        pad = n_pad - n
        rows = n_pad // lane
        ok = pad * 16 <= n
        score = (ok, ok and lane >= 512, pad == 0, -pad, rows % pack == 0, lane)
        if best is None or score > best[0]:
            best = (score, lane, n_pad)
    return best[1], best[2]


def _choose_blocks(batch: int, rows: int, lane: int, itemsize: int, pack: int,
                   target_bytes: int):
    """Return (blk_b, blk_r, grid_b, grid_r) using sublane-PADDED footprints."""
    def blk_bytes(bb, br):
        return bb * _round_up(br, pack) * lane * itemsize

    slab = blk_bytes(1, rows)                       # one image's padded slab
    if slab <= target_bytes:
        blk_r = rows
        blk_b = max(1, min(batch, target_bytes // slab))
        while batch % blk_b:                        # avoid ragged batch blocks
            blk_b -= 1
        grid_b, grid_r = batch // blk_b, 1
        # v7x has 2 TensorCores: keep >= 2 parallel steps for non-trivial sizes.
        if grid_b * grid_r == 1 and batch * slab >= (2 << 20):
            if batch > 1:
                blk_b = max(1, blk_b // 2)
                while batch % blk_b:
                    blk_b -= 1
                grid_b = batch // blk_b
            elif rows > pack:
                blk_r = min(rows, max(pack, _round_up(-(-rows // 2), pack)))
                grid_r = -(-rows // blk_r)
    else:
        blk_b = 1
        blk_r = min(rows, max(pack,
                              (target_bytes // (lane * itemsize)) // pack * pack))
        grid_b, grid_r = batch, -(-rows // blk_r)   # ragged last row-block is OK
    return blk_b, blk_r, grid_b, grid_r


def _add_pos_kernel(x_ref, pos_ref, o_ref):
    """x_ref/o_ref: (blk_b, blk_r, L); pos_ref: (blk_r, L).

    Single VPU add; pos broadcasts over the leading batch-block axis."""
    o_ref[...] = (x_ref[...] + pos_ref[...][None]).astype(o_ref.dtype)


def position_encoder(feature_map, row_embed, col_embed, *,
                     use_pallas=None, donate_feature_map=False):
    """feature_map: (B, C, H, W) with C == num_pos_feats.
    row_embed: (H, num_pos_feats // 2); col_embed: (W, num_pos_feats // 2).
    Returns feature_map + pos_embedding, shape (B, C, H, W)."""
    B, C, H, W = feature_map.shape
    hr = row_embed.shape[1]
    hc = col_embed.shape[1]
    assert C == hr + hc, "channels must equal num_pos_feats"
    assert row_embed.shape[0] == H and col_embed.shape[0] == W

    out_dtype = jnp.result_type(feature_map.dtype, row_embed.dtype,
                                col_embed.dtype)
    itemsize = jnp.dtype(out_dtype).itemsize

    # Positional slab, built once, directly in NCHW channel order.  Mirrors
    # torch.cat([row_embedding, col_embedding], dim=-1).permute(2, 0, 1):
    #   pos[c, h, w]      = row_embed[h, c]   for c < hr
    #   pos[hr + c, h, w] = col_embed[w, c]   for c < hc
    pos_row = jnp.broadcast_to(row_embed.T[:, :, None], (hr, H, W))
    pos_col = jnp.broadcast_to(col_embed.T[:, None, :], (hc, H, W))
    pos = jnp.concatenate([pos_row, pos_col], axis=0).astype(out_dtype)

    N = C * H * W
    if use_pallas is None:
        use_pallas = B * N * itemsize >= (2 << 20)
    if not use_pallas:
        # Tiny problem: kernel launch / pipeline setup dominates; let XLA fuse.
        return feature_map.astype(out_dtype) + pos[None]

    # --- fully sublane/lane-dense flat view ---------------------------------
    pack = 8 * max(1, 4 // itemsize)        # sublane rows per native tile
    L, N_pad = _choose_lane_layout(N, pack)
    R = N_pad // L

    x = feature_map.reshape(B, N).astype(out_dtype)
    p = pos.reshape(1, N)
    if N_pad != N:
        x = jnp.pad(x, ((0, 0), (0, N_pad - N)))
        p = jnp.pad(p, ((0, 0), (0, N_pad - N)))
    x3 = x.reshape(B, R, L)                 # free row-major views
    p2 = p.reshape(R, L)

    # --- block sizing with padded-footprint VMEM accounting -----------------
    vmem_phys = max(_physical_vmem_bytes(), 64 << 20)
    # 2x(x) + 2x(out) + 2x(pos) buffers + ~4 MiB headroom must fit 3/4 of VMEM.
    target = min(max((vmem_phys * 3 // 4 - (4 << 20)) // 6, 3 << 20), 14 << 20)
    blk_b, blk_r, grid_b, grid_r = _choose_blocks(B, R, L, itemsize, pack, target)

    x_blk = blk_b * _round_up(blk_r, pack) * L * itemsize
    p_blk = _round_up(min(blk_r, R), pack) * L * itemsize
    vmem_needed = 2 * (2 * x_blk + p_blk)
    vmem_limit = int(min(max(vmem_needed + (4 << 20), 16 << 20),
                         vmem_phys * 3 // 4))

    extra = {}
    if donate_feature_map:
        # Caller promises it no longer needs feature_map: reuse its buffer.
        extra["input_output_aliases"] = {0: 0}

    out3 = pl.pallas_call(
        _add_pos_kernel,
        out_shape=jax.ShapeDtypeStruct((B, R, L), out_dtype),
        # Row-block axis OUTER, batch-block axis INNER: the pos block index is
        # constant across the inner axis, so Pallas fetches pos once per row
        # block instead of once per grid step.
        grid=(grid_r, grid_b),
        in_specs=[
            pl.BlockSpec((blk_b, blk_r, L), lambda jr, ib: (ib, jr, 0)),
            pl.BlockSpec((blk_r, L), lambda jr, ib: (jr, 0)),
        ],
        out_specs=pl.BlockSpec((blk_b, blk_r, L), lambda jr, ib: (ib, jr, 0)),
        compiler_params=pltpu.CompilerParams(
            dimension_semantics=("parallel", "parallel"),
            vmem_limit_bytes=vmem_limit),
        **extra,
    )(x3, p2)

    out = out3.reshape(B, N_pad)
    if N_pad != N:
        out = out[:, :N]
    return out.reshape(B, C, H, W)


def _reference(feature_map, row_embed, col_embed):
    """Pure-JAX mirror of the PyTorch forward."""
    B, C, H, W = feature_map.shape
    hr = row_embed.shape[1]
    row_b = jnp.broadcast_to(row_embed[:, None, :], (H, W, hr))
    col_b = jnp.broadcast_to(col_embed[None, :, :], (H, W, C - hr))
    pos = jnp.concatenate([row_b, col_b], axis=-1)        # (H, W, C)
    pos = jnp.transpose(pos, (2, 0, 1))[None]             # (1, C, H, W)
    return feature_map + pos


if __name__ == "__main__":
    # --- main check: small shapes consistent with the module ----------------
    B, H, W, P = 2, 8, 8, 32
    k_x, k_row, k_col = jax.random.split(jax.random.PRNGKey(0), 3)
    feature_map = jax.random.normal(k_x, (B, P, H, W), dtype=jnp.float32)
    row_embed = jax.random.uniform(k_row, (H, P // 2), jnp.float32, -0.1, 0.1)
    col_embed = jax.random.uniform(k_col, (W, P // 2), jnp.float32, -0.1, 0.1)

    # Force the Pallas path (the auto heuristic would use the fused XLA add).
    out = jax.block_until_ready(
        position_encoder(feature_map, row_embed, col_embed, use_pallas=True))
    ref = _reference(feature_map, row_embed, col_embed)
    assert out.shape == feature_map.shape and out.dtype == ref.dtype
    assert jnp.allclose(out, ref, atol=1e-6, rtol=1e-6)

    # --- realistic channels (C=256, 7x7): full-dim sublane block path --------
    k_x2, k_row2, k_col2 = jax.random.split(jax.random.PRNGKey(1), 3)
    fm2 = jax.random.normal(k_x2, (4, 256, 7, 7), dtype=jnp.float32)
    re2 = jax.random.uniform(k_row2, (7, 128), jnp.float32, -0.1, 0.1)
    ce2 = jax.random.uniform(k_col2, (7, 128), jnp.float32, -0.1, 0.1)
    out2 = jax.block_until_ready(position_encoder(fm2, re2, ce2, use_pallas=True))
    assert jnp.allclose(out2, _reference(fm2, re2, ce2), atol=1e-6, rtol=1e-6)

    # --- N not divisible by 128: lane-padding path ---------------------------
    k_x3, k_row3, k_col3 = jax.random.split(jax.random.PRNGKey(2), 3)
    fm3 = jax.random.normal(k_x3, (3, 6, 5, 7), dtype=jnp.float32)
    re3 = jax.random.uniform(k_row3, (5, 3), jnp.float32, -0.1, 0.1)
    ce3 = jax.random.uniform(k_col3, (7, 3), jnp.float32, -0.1, 0.1)
    out3 = jax.block_until_ready(position_encoder(fm3, re3, ce3, use_pallas=True))
    assert jnp.allclose(out3, _reference(fm3, re3, ce3), atol=1e-6, rtol=1e-6)

    # --- multi-step grid (batch blocked, pos resident across inner axis) ----
    k_x4, k_row4, k_col4 = jax.random.split(jax.random.PRNGKey(3), 3)
    fm4 = jax.random.normal(k_x4, (8, 256, 16, 16), dtype=jnp.float32)
    re4 = jax.random.uniform(k_row4, (16, 128), jnp.float32, -0.1, 0.1)
    ce4 = jax.random.uniform(k_col4, (16, 128), jnp.float32, -0.1, 0.1)
    out4 = jax.block_until_ready(position_encoder(fm4, re4, ce4, use_pallas=True))
    assert jnp.allclose(out4, _reference(fm4, re4, ce4), atol=1e-6, rtol=1e-6)

    # --- default (fused XLA) fast path for tiny problems ---------------------
    out_fast = jax.block_until_ready(
        position_encoder(feature_map, row_embed, col_embed))
    assert jnp.allclose(out_fast, ref, atol=1e-6, rtol=1e-6)

    print("KERNEL_OK")
</pallas_src>

<mosaic_0001>
module attributes {stable_mosaic.version = 11 : i64} {
  func.func @_add_pos_kernel(%arg0: i32, %arg1: i32, %arg2: memref<2x1x2048xf32, #tpu.memory_space<vmem>>, %arg3: memref<1x2048xf32, #tpu.memory_space<vmem>>, %arg4: memref<2x1x2048xf32, #tpu.memory_space<vmem>>) attributes {dimension_semantics = [#tpu.dimension_semantics<parallel>, #tpu.dimension_semantics<parallel>], iteration_bounds = array<i64: 1, 1>, scalar_prefetch = 0 : i64, scratch_operands = 0 : i64, tpu.core_type = #tpu.core_type<tc>, window_params = [{transform_indices = @transform_0, window_bounds = array<i64: 2, 1, 2048>}, {transform_indices = @transform_1, window_bounds = array<i64: 1, 2048>}, {transform_indices = @transform_2, window_bounds = array<i64: 2, 1, 2048>}]} {
    %c0 = arith.constant 0 : index
    %c0_0 = arith.constant 0 : index
    %c0_1 = arith.constant 0 : index
    %0 = vector.load %arg2[%c0, %c0_0, %c0_1] : memref<2x1x2048xf32, #tpu.memory_space<vmem>>, vector<2x1x2048xf32>
    %c0_2 = arith.constant 0 : index
    %c0_3 = arith.constant 0 : index
    %1 = vector.load %arg3[%c0_2, %c0_3] : memref<1x2048xf32, #tpu.memory_space<vmem>>, vector<1x2048xf32>
    %2 = vector.shape_cast %1 : vector<1x2048xf32> to vector<1x1x2048xf32>
    %3 = vector.broadcast %2 : vector<1x1x2048xf32> to vector<2x1x2048xf32>
    %4 = arith.addf %0, %3 : vector<2x1x2048xf32>
    %c0_4 = arith.constant 0 : index
    %c0_5 = arith.constant 0 : index
    %c0_6 = arith.constant 0 : index
    %5 = vector.load %arg4[%c0_4, %c0_5, %c0_6] : memref<2x1x2048xf32, #tpu.memory_space<vmem>>, vector<2x1x2048xf32>
    tpu.vector_store %arg4[%c0_4, %c0_5, %c0_6], %4 {strides = array<i32>} : memref<2x1x2048xf32, #tpu.memory_space<vmem>>, vector<2x1x2048xf32>,
    return
  }
  func.func @transform_0(%arg0: i32, %arg1: i32) -> (i32, i32, i32) {
    %c0_i32 = arith.constant 0 : i32
    %c0_i32_0 = arith.constant 0 : i32
    return %arg1, %arg0, %c0_i32 : i32, i32, i32
  }
  func.func @transform_1(%arg0: i32, %arg1: i32) -> (i32, i32) {
    %c0_i32 = arith.constant 0 : i32
    %c0_i32_0 = arith.constant 0 : i32
    return %arg0, %c0_i32 : i32, i32
  }
  func.func @transform_2(%arg0: i32, %arg1: i32) -> (i32, i32, i32) {
    %c0_i32 = arith.constant 0 : i32
    %c0_i32_0 = arith.constant 0 : i32
    return %arg1, %arg0, %c0_i32 : i32, i32, i32
  }
}

</mosaic_0001>

<llo_original>
// kernel: tpu_custom_call.1
$region0: #{tpu_custom_call.1}
  #allocation0 [shape = 'u32[]', space=smem, size = 0x4, offset = 0x4, fixed_abs, tag = 'smem constant byte address 0x4 - core index']
  #allocation1 [shape = 'u32[72,128]{1,0:T(1,128)}', space=vmem, size = 0x9000, scoped, tag = 'internal scratch']
  %s0 = inlined_call_operand.hbm [shape: f32[2,1,2048], index: 0, kind: input, shape index: {}]
  %s1 = inlined_call_operand.hbm [shape: f32[1,2048], index: 1, kind: input, shape index: {}]
  %s2 = inlined_call_operand.hbm [shape: f32[2,1,2048], index: 2, kind: output, shape index: {}]
  %s3 = sld [smem:[#allocation0]]
  $region26: #{tpu_custom_call.1} parent=0
    _
  %s5 = ssub.s32 1, %s3
  %s6 = scalar_select 0, %s5, %s3
  $region1: #{tpu_custom_call.1} parent=0
    #allocation2 [shape = 'u8[16384]{0}', space=vmem, size = 0x4000, scoped, tag = 'input window, operand 0, single buffered']
    #allocation3 [shape = 's32[1]{0}', space=sflag, size = 0x4, scoped, tag = 'scoped memory for tpu_custom_call.1']
    #allocation4 [shape = 's32[1]{0}', space=sflag, size = 0x4, scoped, tag = 'scoped memory for tpu_custom_call.1']
    #allocation5 [shape = 'u8[8192]{0}', space=vmem, size = 0x2000, scoped, tag = 'input window, operand 1, single buffered']
    #allocation6 [shape = 's32[1]{0}', space=sflag, size = 0x4, scoped, tag = 'scoped memory for tpu_custom_call.1']
    #allocation7 [shape = 'u8[16384]{0}', space=vmem, size = 0x4000, scoped, tag = 'output window, operand 0, single buffered']
    %7 = vsyncpa [#allocation3], 0
    %8 = vsyncpa [#allocation6], 0
    %9 = vsyncpa [#allocation4], 0
    // Predicated region
    $region2: #{tpu_custom_call.1} parent=1 // pred_check
      _
    $region3: #{tpu_custom_call.1} parent=1 // pred_check_branch
      %11 = sbr.rel (0) target = $region5
    $region4: #{tpu_custom_call.1} parent=1 // pred_region
      %13 = vsyncadd [#allocation3], 0
      %s14 = sshll.u32 %s0, 4
      %s15 = int_to_ptr.hbm [resolvable:$true] %s14
      %s16 = sshll.u32 [#allocation2], 4
      %s17 = int_to_ptr.vmem [resolvable:$true] %s16
      %22 = dma.hbm_to_vmem [thread:$0]  %s15, 512, %s17, [#allocation3], 256, 256, 16
    $region5: #{tpu_custom_call.1} parent=1 // pred_fallthru
      _
    // Predicated region
    $region6: #{tpu_custom_call.1} parent=1 // pred_check
      _
    $region7: #{tpu_custom_call.1} parent=1 // pred_check_branch
      %24 = sbr.rel (0) target = $region9
    $region8: #{tpu_custom_call.1} parent=1 // pred_region
      %26 = vsyncadd [#allocation6], 0
      %s28 = sshll.u32 %s1, 4
      %s29 = int_to_ptr.hbm [resolvable:$true] %s28
      %s30 = sshll.u32 [#allocation5], 4
      %s31 = int_to_ptr.vmem [resolvable:$true] %s30
      %33 = dma.hbm_to_vmem [thread:$0]  %s29, 256, %s31, [#allocation6]
    $region9: #{tpu_custom_call.1} parent=1 // pred_fallthru
      _
    // Predicated region
    $region10: #{tpu_custom_call.1} parent=1 // pred_check
      _
    $region11: #{tpu_custom_call.1} parent=1 // pred_check_branch
      %35 = sbr.rel (0) target = $region13
    $region12: #{tpu_custom_call.1} parent=1 // pred_region
      %37 = dma.done [#allocation3], 512
    $region13: #{tpu_custom_call.1} parent=1 // pred_fallthru
      _
    // Predicated region
    $region14: #{tpu_custom_call.1} parent=1 // pred_check
      _
    $region15: #{tpu_custom_call.1} parent=1 // pred_check_branch
      %39 = sbr.rel (0) target = $region17
    $region16: #{tpu_custom_call.1} parent=1 // pred_region
      %41 = dma.done [#allocation6], 256
    $region17: #{tpu_custom_call.1} parent=1 // pred_fallthru
      _
    %v42 = vld [vmem:[#allocation2] sm:$0xff]
    %v43 = vld [vmem:[#allocation2 + $0x8] sm:$0xff]
    %v44 = vld [vmem:[#allocation2 + $0x10] sm:$0xff]
    %v45 = vld [vmem:[#allocation2 + $0x18] sm:$0xff]
    %v46 = vld [vmem:[#allocation5] sm:$0xff]
    %v47 = vld [vmem:[#allocation5 + $0x8] sm:$0xff]
    %v48 = vadd.f32 %v42, %v46
    %v49 = vadd.f32 %v43, %v47
    %v50 = vadd.f32 %v44, %v46
    %v51 = vadd.f32 %v45, %v47
    %52 = vst [vmem:[#allocation7] sm:$0xff] %v48
    %53 = vst [vmem:[#allocation7 + $0x8] sm:$0xff] %v49
    %54 = vst [vmem:[#allocation7 + $0x10] sm:$0xff] %v50
    %55 = vst [vmem:[#allocation7 + $0x18] sm:$0xff] %v51
    // Predicated region
    $region18: #{tpu_custom_call.1} parent=1 // pred_check
      _
    $region19: #{tpu_custom_call.1} parent=1 // pred_check_branch
      %57 = sbr.rel (0) target = $region21
    $region20: #{tpu_custom_call.1} parent=1 // pred_region
      %59 = vsyncadd [#allocation4], 0
      %s60 = sshll.u32 [#allocation7], 4
      %s61 = int_to_ptr.vmem [resolvable:$true] %s60
      %s62 = sshll.u32 %s2, 4
      %s63 = int_to_ptr.hbm [resolvable:$true] %s62
      %68 = dma.vmem_to_hbm [thread:$0]  %s61, 512, %s63, [#allocation4], 256, 256, 16
    $region21: #{tpu_custom_call.1} parent=1 // pred_fallthru
      _
    // Predicated region
    $region22: #{tpu_custom_call.1} parent=1 // pred_check
      _
    $region23: #{tpu_custom_call.1} parent=1 // pred_check_branch
      %70 = sbr.rel (0) target = $region25
    $region24: #{tpu_custom_call.1} parent=1 // pred_region
      %72 = dma.done [#allocation4], 512
    $region25: #{tpu_custom_call.1} parent=1 // pred_fallthru
      _
    %73 = vsyncpa [#allocation3], 1
    %74 = vsyncpa [#allocation6], 1
    %75 = vsyncpa [#allocation4], 1

</llo_original>
